<compile_context>
chip_gen: v5e
topology: v5e:2x2
jax: 0.10.0
libtpu: 0.0.40
codegen_flags: <defaults>
</compile_context>

<pallas_src>
import jax
import jax.numpy as jnp
from jax.experimental import pallas as pl
from jax.experimental.pallas import tpu as pltpu


def _round_up(x, m):
    return (x + m - 1) // m * m


def d_gaussian_kernel(xt_ref, w1b_ref, w2b_ref, wcb_ref, out_ref):
    """One batch tile (batch in lanes): x^T (2, TM) -> fused head slab (2C+1, TM)."""
    xt = xt_ref[...]                                        # (2, TM) f32

    # Layer 1 (K=2): VPU broadcast-FMAs.  x rows broadcast across sublanes
    # (stride-0, cheap); the tiny W1 columns / bias broadcast across lanes.
    w1 = w1b_ref[:, 0:2]                                    # (10, 2)
    b1 = w1b_ref[:, 2:3]                                    # (10, 1)
    h = jnp.tanh(w1[:, 0:1] * xt[0:1, :]
                 + w1[:, 1:2] * xt[1:2, :]
                 + b1)                                      # (10, TM)

    # Layer 2: small MXU matmul (output lanes = TM, lane-dense) + tanh.
    h = jnp.tanh(jnp.dot(w2b_ref[:, 0:10], h,
                         preferred_element_type=jnp.float32)
                 + w2b_ref[:, 10:11])                       # (10, TM)

    # Fused (linear3 + aux + mi + gan heads): one matmul + one bias.
    out = jnp.dot(wcb_ref[:, 0:10], h,
                  preferred_element_type=jnp.float32) + wcb_ref[:, 10:11]

    # sigmoid only on the gan row (last row); two contiguous sublane slices,
    # both lane-dense stores.
    k = out_ref.shape[0]
    out_ref[0:k - 1, :] = out[0:k - 1, :].astype(out_ref.dtype)
    out_ref[k - 1:k, :] = jax.nn.sigmoid(out[k - 1:k, :]).astype(out_ref.dtype)


def init_params(key, num_classes=10, dtype=jnp.float32):
    """Deterministic PyTorch-Linear-style init (uniform(-1/sqrt(fan_in), ...))."""
    def linear(key, fan_in, fan_out):
        kw, kb = jax.random.split(key)
        bound = 1.0 / jnp.sqrt(jnp.asarray(fan_in, dtype))
        w = jax.random.uniform(kw, (fan_out, fan_in), dtype, -bound, bound)
        b = jax.random.uniform(kb, (fan_out,), dtype, -bound, bound)
        return w, b

    keys = jax.random.split(key, 6)
    w1, b1 = linear(keys[0], 2, 10)
    w2, b2 = linear(keys[1], 10, 10)
    w3, b3 = linear(keys[2], 10, 10)
    wg, bg = linear(keys[3], 10, 1)
    wa, ba = linear(keys[4], 10, num_classes)
    wm, bm = linear(keys[5], 10, num_classes)
    return dict(w1=w1, b1=b1, w2=w2, b2=b2, w3=w3, b3=b3,
                wg=wg, bg=bg, wa=wa, ba=ba, wm=wm, bm=bm)


def _choose_tile_m(n, tile_m):
    """Rows (lanes) per grid step."""
    if n <= 128:
        return n                          # one full-extent block (always legal)
    tile_m = max(128, _round_up(tile_m, 128))
    # Keep >= 2 grid steps when possible so the "parallel" batch axis can
    # shard across both TensorCores (v7x megacore); cap per-step VMEM at tile_m.
    half = _round_up(pl.cdiv(n, 2), 128)
    return min(tile_m, half)


def d_gaussian_forward(x, params, num_classes=10, tile_m=16384,
                       return_slab=False):
    n = x.shape[0]
    dtype = x.dtype
    c_dim = num_classes
    width = 2 * c_dim + 1                 # rows: [c (C) | mi (C) | s (1)]

    # ---- trace-time affine fusion of linear3 into the three heads ----------
    # (column convention)  Wc = [Wa;Wm;Wg] @ W3,  bc = [Wa;Wm;Wg] @ b3 + bias
    wheads = jnp.concatenate([params["wa"], params["wm"], params["wg"]], axis=0)   # (width, 10)
    bheads = jnp.concatenate([params["ba"], params["bm"], params["bg"]], axis=0)   # (width,)
    wc = wheads @ params["w3"]                                                      # (width, 10)
    bc = wheads @ params["b3"] + bheads                                             # (width,)

    # ---- pack bias as a trailing column -> 3 resident param slabs -----------
    w1b = jnp.concatenate([params["w1"], params["b1"][:, None]], axis=1)            # (10, 3)
    w2b = jnp.concatenate([params["w2"], params["b2"][:, None]], axis=1)            # (10, 11)
    wcb = jnp.concatenate([wc, bc[:, None]], axis=1)                                # (width, 11)

    # Feature-major input: batch rides the lane axis inside the kernel.
    xt = x.T                                                                        # (2, n)

    tm = _choose_tile_m(n, tile_m)
    grid = (pl.cdiv(n, tm),)              # ragged last block masked by Pallas

    const = lambda i: (0, 0)              # params stay resident (no re-DMA)

    out_t = pl.pallas_call(
        d_gaussian_kernel,
        out_shape=jax.ShapeDtypeStruct((width, n), dtype),
        grid=grid,
        in_specs=[
            pl.BlockSpec((2, tm), lambda i: (0, i)),      # x^T tile
            pl.BlockSpec((10, 3), const),                 # [W1 | b1]
            pl.BlockSpec((10, 11), const),                # [W2 | b2]
            pl.BlockSpec((width, 11), const),             # [Wc | bc] (fused heads)
        ],
        out_specs=pl.BlockSpec((width, tm), lambda i: (0, i)),
        compiler_params=pltpu.CompilerParams(
            dimension_semantics=("parallel",),            # megacore / v7x 2-TC
            vmem_limit_bytes=32 * 1024 * 1024),
    )(xt, w1b, w2b, wcb)

    if return_slab:
        # Lane-dense (2C+1, N) slab, rows [c | mi | sigmoid(s)]; consumers that
        # can take this layout avoid the transposed slices below entirely.
        return out_t

    # Presentation-layer slices back to the PyTorch output convention.  These
    # are contiguous row-blocks of the slab; the .T is layout plumbing that a
    # fused consumer should avoid (use return_slab=True).
    c = out_t[:c_dim, :].T                # (n, C)
    mi = out_t[c_dim:2 * c_dim, :].T      # (n, C)
    s = out_t[2 * c_dim, :]               # (n,)  == PyTorch's s.squeeze(1)
    return s, c, mi


def d_gaussian_reference(x, params):
    h = jnp.tanh(x @ params["w1"].T + params["b1"])
    h = jnp.tanh(h @ params["w2"].T + params["b2"])
    h = h @ params["w3"].T + params["b3"]
    c = h @ params["wa"].T + params["ba"]
    mi = h @ params["wm"].T + params["bm"]
    s = jax.nn.sigmoid(h @ params["wg"].T + params["bg"])
    return s[:, 0], c, mi


if __name__ == "__main__":
    key = jax.random.PRNGKey(0)
    k_x, k_p = jax.random.split(key)

    batch = 256                   # small demo; exercises a 2-step grid (tm=128)
    num_classes = 10
    x = jax.random.normal(k_x, (batch, 2), dtype=jnp.float32)
    params = init_params(k_p, num_classes=num_classes)

    s, c, mi = d_gaussian_forward(x, params, num_classes=num_classes)
    jax.block_until_ready((s, c, mi))

    s_ref, c_ref, mi_ref = d_gaussian_reference(x, params)
    assert s.shape == (batch,) and c.shape == (batch, num_classes) \
        and mi.shape == (batch, num_classes)
    assert jnp.allclose(s, s_ref, atol=1e-5, rtol=1e-5)
    assert jnp.allclose(c, c_ref, atol=1e-5, rtol=1e-5)
    assert jnp.allclose(mi, mi_ref, atol=1e-5, rtol=1e-5)

    print("KERNEL_OK")
</pallas_src>

<mosaic_0001>
module attributes {stable_mosaic.version = 11 : i64} {
  func.func @d_gaussian_kernel(%arg0: i32, %arg1: memref<2x128xf32, #tpu.memory_space<vmem>>, %arg2: memref<10x3xf32, #tpu.memory_space<vmem>>, %arg3: memref<10x11xf32, #tpu.memory_space<vmem>>, %arg4: memref<21x11xf32, #tpu.memory_space<vmem>>, %arg5: memref<21x128xf32, #tpu.memory_space<vmem>>) attributes {dimension_semantics = [#tpu.dimension_semantics<parallel>], iteration_bounds = array<i64: 2>, scalar_prefetch = 0 : i64, scratch_operands = 0 : i64, tpu.core_type = #tpu.core_type<tc>, window_params = [{transform_indices = @transform_0, window_bounds = array<i64: 2, 128>}, {pipeline_mode = #tpu.pipeline_mode<synchronous>, transform_indices = @transform_1, window_bounds = array<i64: 10, 3>}, {pipeline_mode = #tpu.pipeline_mode<synchronous>, transform_indices = @transform_2, window_bounds = array<i64: 10, 11>}, {pipeline_mode = #tpu.pipeline_mode<synchronous>, transform_indices = @transform_3, window_bounds = array<i64: 21, 11>}, {transform_indices = @transform_4, window_bounds = array<i64: 21, 128>}]} {
    %c0 = arith.constant 0 : index
    %c0_0 = arith.constant 0 : index
    %0 = vector.load %arg1[%c0, %c0_0] : memref<2x128xf32, #tpu.memory_space<vmem>>, vector<2x128xf32>
    %c0_1 = arith.constant 0 : index
    %c0_2 = arith.constant 0 : index
    %1 = vector.load %arg2[%c0_1, %c0_2] : memref<10x3xf32, #tpu.memory_space<vmem>>, vector<10x2xf32>
    %c0_3 = arith.constant 0 : index
    %c2 = arith.constant 2 : index
    %2 = vector.load %arg2[%c0_3, %c2] : memref<10x3xf32, #tpu.memory_space<vmem>>, vector<10x1xf32>
    %3 = vector.extract_strided_slice %1 {offsets = [0, 0], sizes = [10, 1], strides = [1, 1]} : vector<10x2xf32> to vector<10x1xf32>
    %4 = vector.extract_strided_slice %0 {offsets = [0, 0], sizes = [1, 128], strides = [1, 1]} : vector<2x128xf32> to vector<1x128xf32>
    %5 = vector.broadcast %3 : vector<10x1xf32> to vector<10x128xf32>
    %6 = vector.broadcast %4 : vector<1x128xf32> to vector<10x128xf32>
    %7 = arith.mulf %5, %6 : vector<10x128xf32>
    %8 = vector.extract_strided_slice %1 {offsets = [0, 1], sizes = [10, 1], strides = [1, 1]} : vector<10x2xf32> to vector<10x1xf32>
    %9 = vector.extract_strided_slice %0 {offsets = [1, 0], sizes = [1, 128], strides = [1, 1]} : vector<2x128xf32> to vector<1x128xf32>
    %10 = vector.broadcast %8 : vector<10x1xf32> to vector<10x128xf32>
    %11 = vector.broadcast %9 : vector<1x128xf32> to vector<10x128xf32>
    %12 = arith.mulf %10, %11 : vector<10x128xf32>
    %13 = arith.addf %7, %12 : vector<10x128xf32>
    %14 = vector.broadcast %2 : vector<10x1xf32> to vector<10x128xf32>
    %15 = arith.addf %13, %14 : vector<10x128xf32>
    %16 = math.tanh %15 : vector<10x128xf32>
    %c0_4 = arith.constant 0 : index
    %c0_5 = arith.constant 0 : index
    %17 = vector.load %arg3[%c0_4, %c0_5] : memref<10x11xf32, #tpu.memory_space<vmem>>, vector<10x10xf32>
    %cst = arith.constant dense<0.000000e+00> : vector<10x128xf32>
    %18 = tpu.matmul %17, %16, %cst {dimension_numbers = #tpu.dot_dimension_numbers<[1], [0], [0], [1], [0, 0, 1, 1], [], []>} : vector<10x10xf32>, vector<10x128xf32>, vector<10x128xf32> -> vector<10x128xf32>
    %c0_6 = arith.constant 0 : index
    %c10 = arith.constant 10 : index
    %19 = vector.load %arg3[%c0_6, %c10] : memref<10x11xf32, #tpu.memory_space<vmem>>, vector<10x1xf32>
    %20 = vector.broadcast %19 : vector<10x1xf32> to vector<10x128xf32>
    %21 = arith.addf %18, %20 : vector<10x128xf32>
    %22 = math.tanh %21 : vector<10x128xf32>
    %c0_7 = arith.constant 0 : index
    %c0_8 = arith.constant 0 : index
    %23 = vector.load %arg4[%c0_7, %c0_8] : memref<21x11xf32, #tpu.memory_space<vmem>>, vector<21x10xf32>
    %cst_9 = arith.constant dense<0.000000e+00> : vector<21x128xf32>
    %24 = tpu.matmul %23, %22, %cst_9 {dimension_numbers = #tpu.dot_dimension_numbers<[1], [0], [0], [1], [0, 0, 1, 1], [], []>} : vector<21x10xf32>, vector<10x128xf32>, vector<21x128xf32> -> vector<21x128xf32>
    %c0_10 = arith.constant 0 : index
    %c10_11 = arith.constant 10 : index
    %25 = vector.load %arg4[%c0_10, %c10_11] : memref<21x11xf32, #tpu.memory_space<vmem>>, vector<21x1xf32>
    %26 = vector.broadcast %25 : vector<21x1xf32> to vector<21x128xf32>
    %27 = arith.addf %24, %26 : vector<21x128xf32>
    %28 = vector.extract_strided_slice %27 {offsets = [0, 0], sizes = [20, 128], strides = [1, 1]} : vector<21x128xf32> to vector<20x128xf32>
    %c0_12 = arith.constant 0 : index
    %c0_13 = arith.constant 0 : index
    %29 = vector.load %arg5[%c0_12, %c0_13] : memref<21x128xf32, #tpu.memory_space<vmem>>, vector<20x128xf32>
    tpu.vector_store %arg5[%c0_12, %c0_13], %28 {strides = array<i32>} : memref<21x128xf32, #tpu.memory_space<vmem>>, vector<20x128xf32>,
    %30 = vector.extract_strided_slice %27 {offsets = [20, 0], sizes = [1, 128], strides = [1, 1]} : vector<21x128xf32> to vector<1x128xf32>
    %31 = arith.negf %30 : vector<1x128xf32>
    %32 = math.exp %31 : vector<1x128xf32>
    %cst_14 = arith.constant 1.000000e+00 : f32
    %33 = vector.broadcast %cst_14 : f32 to vector<1x128xf32>
    %34 = arith.addf %33, %32 : vector<1x128xf32>
    %35 = arith.divf %33, %34 : vector<1x128xf32>
    %c20 = arith.constant 20 : index
    %c0_15 = arith.constant 0 : index
    %36 = vector.load %arg5[%c20, %c0_15] : memref<21x128xf32, #tpu.memory_space<vmem>>, vector<1x128xf32>
    tpu.vector_store %arg5[%c20, %c0_15], %35 {strides = array<i32>} : memref<21x128xf32, #tpu.memory_space<vmem>>, vector<1x128xf32>,
    return
  }
  func.func @transform_0(%arg0: i32) -> (i32, i32) {
    %c0_i32 = arith.constant 0 : i32
    %c0_i32_0 = arith.constant 0 : i32
    return %c0_i32, %arg0 : i32, i32
  }
  func.func @transform_1(%arg0: i32) -> (i32, i32) {
    %c0_i32 = arith.constant 0 : i32
    %c0_i32_0 = arith.constant 0 : i32
    %c0_i32_1 = arith.constant 0 : i32
    return %c0_i32, %c0_i32_0 : i32, i32
  }
  func.func @transform_2(%arg0: i32) -> (i32, i32) {
    %c0_i32 = arith.constant 0 : i32
    %c0_i32_0 = arith.constant 0 : i32
    %c0_i32_1 = arith.constant 0 : i32
    return %c0_i32, %c0_i32_0 : i32, i32
  }
  func.func @transform_3(%arg0: i32) -> (i32, i32) {
    %c0_i32 = arith.constant 0 : i32
    %c0_i32_0 = arith.constant 0 : i32
    %c0_i32_1 = arith.constant 0 : i32
    return %c0_i32, %c0_i32_0 : i32, i32
  }
  func.func @transform_4(%arg0: i32) -> (i32, i32) {
    %c0_i32 = arith.constant 0 : i32
    %c0_i32_0 = arith.constant 0 : i32
    return %c0_i32, %arg0 : i32, i32
  }
}

</mosaic_0001>

<llo_original>
// kernel: tpu_custom_call.1
$region0: #{tpu_custom_call.1}
  #allocation0 [shape = 'u32[]', space=smem, size = 0x4, offset = 0x4, fixed_abs, tag = 'smem constant byte address 0x4 - core index']
  #allocation1 [shape = 'u32[72,128]{1,0:T(1,128)}', space=vmem, size = 0x9000, scoped, tag = 'internal scratch']
  %s0 = inlined_call_operand.vmem [shape: f32[2,256], index: 0, kind: input, shape index: {}]
  %s1 = inlined_call_operand.vmem [shape: f32[10,3], index: 1, kind: input, shape index: {}]
  %s2 = inlined_call_operand.vmem [shape: f32[10,11], index: 2, kind: input, shape index: {}]
  %s3 = inlined_call_operand.vmem [shape: f32[21,11], index: 3, kind: input, shape index: {}]
  %s4 = inlined_call_operand.hbm [shape: f32[21,256], index: 4, kind: output, shape index: {}]
  %s5 = sld [smem:[#allocation0]]
  $region49: #{tpu_custom_call.1} parent=0
    _
  %s7 = ssub.s32 1, %s5
  %s8 = scalar_select 0, %s7, %s5
  $region1: #{tpu_custom_call.1} parent=0
    #allocation2 [shape = 'u8[24576]{0}', space=vmem, size = 0x6000, scoped, tag = 'output window, operand 0']
    #allocation3 [shape = 's32[2]{0}', space=sflag, size = 0x8, scoped, tag = 'scoped memory for tpu_custom_call.1']
    %9 = vsyncpa [#allocation3], 0
    %s10 = scalar_lea.sflag [#allocation3], 1
    %11 = vsyncpa %s10, 0
    loop: start=0, step=1, limit=4
    $region2: #{tpu_custom_call.1} parent=1 // loop_pre_header
      _
    $region3: #{tpu_custom_call.1} parent=1 // loop_header
      %s13 = sphi 0, %s17
      %p14 = scmp.ge.s32.totalorder %s13, 4
      %s23 = sphi 0, %s25
      %s26 = sphi 0, %s23
      %s27 = sphi 0, %s26
      %s43 = sphi 0, %s27
      %s47 = sphi 0, %s47
      %s49 = sphi 0, %s47
      %s50 = sphi 0, %s49
      %s64 = sphi 0, %s50
      %s68 = sphi 0, %s68
      %s70 = sphi 0, %s68
      %s71 = sphi 0, %s70
      %s85 = sphi 0, %s71
      %s89 = sphi 0, %s89
      %s91 = sphi 0, %s89
      %s92 = sphi 0, %s91
      %s106 = sphi 0, %s92
      %s112 = sphi 0, %s114
      %s115 = sphi 0, %s112
      %s116 = sphi 0, %s115
      %s132 = sphi 0, %s116
    $region4: #{tpu_custom_call.1} parent=1 // loop_header_branch
      %16 = sbr.rel (%p14) target = $region8
    $region5: #{tpu_custom_call.1} parent=1 // loop_body
      %s18 = ssub.s32 %s13, 1
      %s19 = ssub.s32 %s13, 2
      %s20 = sadd.s32 %s13, 1
      %s21 = ssub.s32 %s13, %s20
      %p22 = scmp.eq.s32.totalorder %s21, 0
      %s24 = sadd.s32 %s23, 1
      %s25 = scalar_select %p22, %s23, %s24
      %p28 = pneg %p22
      %p29 = scmp.eq.s32.totalorder %s13, 1
      %p30 = por %p28, %p29
      %p31 = scmp.ne.s32.totalorder %s23, %s26
      %p32 = scmp.eq.s32.totalorder %s13, 0
      %p33 = por %p31, %p32
      %p34 = scmp.ne.s32.totalorder %s23, %s26
      %p35 = scmp.eq.s32.totalorder %s18, 1
      %p36 = por %p34, %p35
      %p37 = scmp.ne.s32.totalorder %s26, %s27
      %p38 = scmp.eq.s32.totalorder %s18, 0
      %p39 = por %p37, %p38
      %p40 = scmp.ne.s32.totalorder %s26, %s27
      %p41 = scmp.eq.s32.totalorder %s19, 1
      %p42 = por %p40, %p41
      %p44 = scmp.ne.s32.totalorder %s27, %s43
      %p45 = scmp.eq.s32.totalorder %s19, 0
      %p46 = por %p44, %p45
      %s48 = sadd.s32 %s47, 1
      %p51 = scmp.eq.s32.totalorder %s13, 1
      %p52 = scmp.ne.s32.totalorder %s47, %s49
      %p53 = scmp.eq.s32.totalorder %s13, 0
      %p54 = por %p52, %p53
      %p55 = scmp.ne.s32.totalorder %s47, %s49
      %p56 = scmp.eq.s32.totalorder %s18, 1
      %p57 = por %p55, %p56
      %p58 = scmp.ne.s32.totalorder %s49, %s50
      %p59 = scmp.eq.s32.totalorder %s18, 0
      %p60 = por %p58, %p59
      %p61 = scmp.ne.s32.totalorder %s49, %s50
      %p62 = scmp.eq.s32.totalorder %s19, 1
      %p63 = por %p61, %p62
      %p65 = scmp.ne.s32.totalorder %s50, %s64
      %p66 = scmp.eq.s32.totalorder %s19, 0
      %p67 = por %p65, %p66
      %s69 = sadd.s32 %s68, 1
      %p72 = scmp.eq.s32.totalorder %s13, 1
      %p73 = scmp.ne.s32.totalorder %s68, %s70
      %p74 = scmp.eq.s32.totalorder %s13, 0
      %p75 = por %p73, %p74
      %p76 = scmp.ne.s32.totalorder %s68, %s70
      %p77 = scmp.eq.s32.totalorder %s18, 1
      %p78 = por %p76, %p77
      %p79 = scmp.ne.s32.totalorder %s70, %s71
      %p80 = scmp.eq.s32.totalorder %s18, 0
      %p81 = por %p79, %p80
      %p82 = scmp.ne.s32.totalorder %s70, %s71
      %p83 = scmp.eq.s32.totalorder %s19, 1
      %p84 = por %p82, %p83
      %p86 = scmp.ne.s32.totalorder %s71, %s85
      %p87 = scmp.eq.s32.totalorder %s19, 0
      %p88 = por %p86, %p87
      %s90 = sadd.s32 %s89, 1
      %p93 = scmp.eq.s32.totalorder %s13, 1
      %p94 = scmp.ne.s32.totalorder %s89, %s91
      %p95 = scmp.eq.s32.totalorder %s13, 0
      %p96 = por %p94, %p95
      %p97 = scmp.ne.s32.totalorder %s89, %s91
      %p98 = scmp.eq.s32.totalorder %s18, 1
      %p99 = por %p97, %p98
      %p100 = scmp.ne.s32.totalorder %s91, %s92
      %p101 = scmp.eq.s32.totalorder %s18, 0
      %p102 = por %p100, %p101
      %p103 = scmp.ne.s32.totalorder %s91, %s92
      %p104 = scmp.eq.s32.totalorder %s19, 1
      %p105 = por %p103, %p104
      %p107 = scmp.ne.s32.totalorder %s92, %s106
      %p108 = scmp.eq.s32.totalorder %s19, 0
      %p109 = por %p107, %p108
      %s110 = ssub.s32 %s13, %s20
      %p111 = scmp.eq.s32.totalorder %s110, 0
      %s113 = sadd.s32 %s112, 1
      %s114 = scalar_select %p111, %s112, %s113
      %p117 = pneg %p111
      %p118 = scmp.eq.s32.totalorder %s13, 1
      %p119 = por %p117, %p118
      %p120 = scmp.ne.s32.totalorder %s112, %s115
      %p121 = scmp.eq.s32.totalorder %s13, 0
      %p122 = por %p120, %p121
      %p123 = scmp.ne.s32.totalorder %s112, %s115
      %p124 = scmp.eq.s32.totalorder %s18, 1
      %p125 = por %p123, %p124
      %p126 = scmp.ne.s32.totalorder %s115, %s116
      %p127 = scmp.eq.s32.totalorder %s18, 0
      %p128 = por %p126, %p127
      %p129 = scmp.ne.s32.totalorder %s115, %s116
      %p130 = scmp.eq.s32.totalorder %s19, 1
      %p131 = por %p129, %p130
      %p133 = scmp.ne.s32.totalorder %s116, %s132
      %p134 = scmp.eq.s32.totalorder %s19, 0
      %p135 = por %p133, %p134
      %p136 = scmp.le.s32.totalorder 1, %s13
      %p137 = scmp.lt.s32.totalorder %s13, 3
      %p138 = pnand %p136, %p137
      %p139 = pneg %p138
      // Predicated region
      $region9: #{tpu_custom_call.1} parent=5 // pred_check
        _
      $region10: #{tpu_custom_call.1} parent=5 // pred_check_branch
        %141 = sbr.rel (%p138) target = $region12
      $region11: #{tpu_custom_call.1} parent=5 // pred_region
        %s142 = ssub.s32 %s13, 1
        // Predicated region
        $region13: #{tpu_custom_call.1} parent=11 // pred_check
          %p143 = pneg %p60
        $region14: #{tpu_custom_call.1} parent=11 // pred_check_branch
          %145 = sbr.rel (%p143) target = $region16
        $region15: #{tpu_custom_call.1} parent=11 // pred_region
          _
        $region16: #{tpu_custom_call.1} parent=11 // pred_fallthru
          _
        // Predicated region
        $region17: #{tpu_custom_call.1} parent=11 // pred_check
          %p146 = pneg %p81
        $region18: #{tpu_custom_call.1} parent=11 // pred_check_branch
          %148 = sbr.rel (%p146) target = $region20
        $region19: #{tpu_custom_call.1} parent=11 // pred_region
          _
        $region20: #{tpu_custom_call.1} parent=11 // pred_fallthru
          _
        // Predicated region
        $region21: #{tpu_custom_call.1} parent=11 // pred_check
          %p149 = pneg %p102
        $region22: #{tpu_custom_call.1} parent=11 // pred_check_branch
          %151 = sbr.rel (%p149) target = $region24
        $region23: #{tpu_custom_call.1} parent=11 // pred_region
          _
        $region24: #{tpu_custom_call.1} parent=11 // pred_fallthru
          _
      $region12: #{tpu_custom_call.1} parent=5 // pred_fallthru
        _
      %p152 = scmp.lt.s32.totalorder %s13, 2
      // Predicated region
      $region25: #{tpu_custom_call.1} parent=5 // pred_check
        %p153 = pneg %p152
      $region26: #{tpu_custom_call.1} parent=5 // pred_check_branch
        %155 = sbr.rel (%p153) target = $region28
      $region27: #{tpu_custom_call.1} parent=5 // pred_region
        // Predicated region
        $region29: #{tpu_custom_call.1} parent=27 // pred_check
          %p156 = pneg %p33
        $region30: #{tpu_custom_call.1} parent=27 // pred_check_branch
          %158 = sbr.rel (%p156) target = $region32
        $region31: #{tpu_custom_call.1} parent=27 // pred_region
          %p159 = scmp.lt.s32.totalorder %s13, 1
          %s160 = scalar_select %p159, %s13, 1
          %s161 = smul.addr %s160, 2
          %s162 = scalar_lea.vmem %s0, %s161
        $region32: #{tpu_custom_call.1} parent=27 // pred_fallthru
          _
      $region28: #{tpu_custom_call.1} parent=5 // pred_fallthru
        _
      %p163 = scmp.le.s32.totalorder 1, %s13
      %p164 = scmp.lt.s32.totalorder %s13, 3
      %p165 = pnand %p163, %p164
      %p166 = pneg %p165
      // Predicated region
      $region33: #{tpu_custom_call.1} parent=5 // pred_check
        _
      $region34: #{tpu_custom_call.1} parent=5 // pred_check_branch
        %168 = sbr.rel (%p165) target = $region36
      $region35: #{tpu_custom_call.1} parent=5 // pred_region
        %s169 = ssub.s32 %s13, 1
        %p170 = scmp.lt.s32.totalorder %s18, 1
        %s171 = scalar_select %p170, %s18, 1
        %s172 = smul.addr %s171, 2
        %s173 = scalar_lea.vmem %s0, %s172
        %p174 = pneg %p39
        %p175 = pneg %p36
        %p176 = pneg %p60
        %p177 = pneg %p57
        %p178 = pneg %p81
        %p179 = pneg %p78
        %p180 = pneg %p102
        %p181 = pneg %p99
        %p182 = pneg %p128
        %p183 = pneg %p125
        %s184 = sand.u32 %s115, 1
        %s185 = scalar_lea.sflag [#allocation3], %s184
        %s186 = sand.u32 %s115, 1
        %s187 = smul.addr %s186, 24
        %s188 = scalar_lea.vmem [#allocation2], %s187
        %p189 = scmp.lt.s32.totalorder %s18, 1
        %s190 = scalar_select %p189, %s18, 1
        %s191 = smul.addr %s190, 2
        %s192 = scalar_lea.vmem %s0, %s191
        %v193 = vld [vmem:[%s192] sm:$0x3]
        %v194 = vld [vmem:[%s1] sm:$0xff]
        %v195 = vld [vmem:[%s1 + $0x8] sm:$0x3]
        %197 = vset.pattern.permute.xlu0 0
        %198 = vperm.xlu0 %197, %v194
        %v199 = vpop.permute.xlu0 %198
        %202 = vset.pattern.permute.xlu0 0
        %203 = vperm.xlu0 %202, %v195
        %v204 = vpop.permute.xlu0 %203
        %v206 = vperm.slane %v193, 0
        %v207 = vmul.f32 %v199, %v206
        %v208 = vmul.f32 %v204, %v206
        %209 = vset.pattern.permute.xlu0 1
        %210 = vperm.xlu0 %209, %v194
        %v211 = vpop.permute.xlu0 %210
        %213 = vset.pattern.permute.xlu0 1
        %214 = vperm.xlu0 %213, %v195
        %v215 = vpop.permute.xlu0 %214
        %v217 = vperm.slane %v193, 1
        %v218 = vmul.f32 %v211, %v217
        %v219 = vmul.f32 %v215, %v217
        %v220 = vadd.f32 %v207, %v218
        %v221 = vadd.f32 %v208, %v219
        %222 = vset.pattern.permute.xlu0 2
        %223 = vperm.xlu0 %222, %v194
        %v224 = vpop.permute.xlu0 %223
        %226 = vset.pattern.permute.xlu0 2
        %227 = vperm.xlu0 %226, %v195
        %v228 = vpop.permute.xlu0 %227
        %v230 = vadd.f32 %v220, %v224
        %v231 = vadd.f32 %v221, %v228
        %v232 = vtanh.pop %v230
        %v233 = vtanh.pop %v231
        %v234 = vld [vmem:[%s2] sm:$0xff]
        %v235 = vld [vmem:[%s2 + $0x8] sm:$0x3]
        %237 = vset.pattern.permute.xlu0 10
        %238 = vperm.xlu0 %237, %v234
        %v239 = vpop.permute.xlu0 %238
        %242 = vset.pattern.permute.xlu0 10
        %243 = vperm.xlu0 %242, %v235
        %v244 = vpop.permute.xlu0 %243
        %vm246 = vcmask 80896
        %v247 = vsel %vm246, %v234, 0
        %v249 = vsel %vm246, %v235, 0
        %vm251 = vcmask 1041408
        %v253 = vsel %vm251, %v233, 0
        %255 = vmatpush.msra.mxu0 0.0
        %256 = vmatpush.msra.mxu0 0.0
        %257 = vmatpush.msra.mxu0 0.0
        %258 = vmatpush.msra.mxu0 0.0
        %259 = vmatpush.msra.mxu0 0.0
        %260 = vmatpush.msra.mxu0 0.0
        %261 = vmatpush.msra.mxu0 0.0
        %262 = vmatpush.msra.mxu0 0.0
        %263 = vmatpush.msra.mxu0 0.0
        %264 = vmatpush.msra.mxu0 0.0
        %265 = vmatpush.msra.mxu0 0.0
        %266 = vmatpush.msra.mxu0 0.0
        %267 = vmatpush.msra.mxu0 0.0
        %268 = vmatpush.msra.mxu0 0.0
        %269 = vmatpush.msra.mxu0 %v253
        %270 = vmatpush.msra.mxu0 %v232
        %271 = vmatmul.f32.gmra.mxu0 %v247
        %v272 = vpop.f32.mrf.mxu0
        %v273 = vadd.f32 %v239, %v272
        %274 = vmatmul.f32.gmra.mxu0 %v249
        %v275 = vpop.f32.mrf.mxu0
        %v276 = vadd.f32 %v244, %v275
        %277 = vdwg.mxu0
        %v278 = vtanh.pop %v273
        %v279 = vtanh.pop %v276
        %v280 = vld [vmem:[%s3] sm:$0xff]
        %v281 = vld [vmem:[%s3 + $0x8] sm:$0xff]
        %v282 = vld [vmem:[%s3 + $0x10] sm:$0x1f]
        %284 = vset.pattern.permute.xlu0 10
        %285 = vperm.xlu0 %284, %v280
        %v286 = vpop.permute.xlu0 %285
        %289 = vset.pattern.permute.xlu0 10
        %290 = vperm.xlu0 %289, %v281
        %v291 = vpop.permute.xlu0 %290
        %294 = vset.pattern.permute.xlu0 10
        %295 = vperm.xlu0 %294, %v282
        %v296 = vpop.permute.xlu0 %295
        %v298 = vsel %vm246, %v280, 0
        %v300 = vsel %vm246, %v281, 0
        %v302 = vsel %vm246, %v282, 0
        %v305 = vsel %vm251, %v279, 0
        %307 = vmatpush.msra.mxu0 0.0
        %308 = vmatpush.msra.mxu0 0.0
        %309 = vmatpush.msra.mxu0 0.0
        %310 = vmatpush.msra.mxu0 0.0
        %311 = vmatpush.msra.mxu0 0.0
        %312 = vmatpush.msra.mxu0 0.0
        %313 = vmatpush.msra.mxu0 0.0
        %314 = vmatpush.msra.mxu0 0.0
        %315 = vmatpush.msra.mxu0 0.0
        %316 = vmatpush.msra.mxu0 0.0
        %317 = vmatpush.msra.mxu0 0.0
        %318 = vmatpush.msra.mxu0 0.0
        %319 = vmatpush.msra.mxu0 0.0
        %320 = vmatpush.msra.mxu0 0.0
        %321 = vmatpush.msra.mxu0 %v305
        %322 = vmatpush.msra.mxu0 %v278
        %323 = vmatmul.f32.gmra.mxu0 %v298
        %v324 = vpop.f32.mrf.mxu0
        %v325 = vadd.f32 %v286, %v324
        %326 = vmatmul.f32.gmra.mxu0 %v300
        %v327 = vpop.f32.mrf.mxu0
        %v328 = vadd.f32 %v291, %v327
        %329 = vmatmul.f32.gmra.mxu0 %v302
        %v330 = vpop.f32.mrf.mxu0
        %v331 = vadd.f32 %v296, %v330
        %332 = vdwg.mxu0
        %333 = vst [vmem:[%s188] sm:$0xff] %v325
        %334 = vst [vmem:[%s188 + $0x8] sm:$0xff] %v328
        %335 = vst [vmem:[%s188 + $0x10] sm:$0xf] %v331
        %v336 = vxor.u32 %v331, 2147483648
        %v337 = vmul.f32 %v336, 1.442695
        %v338 = vpow.pop %v337
        %v339 = vadd.f32 %v338, 1.0
        %v340 = vrcp.pop %v339
        %v341 = vmul.f32 %v339, %v340
        %v342 = vsub.f32 1.0, %v341
        %v343 = vmul.f32 %v340, %v342
        %v344 = vadd.f32 %v340, %v343
        %vm345 = vweird.f32 %v339
        %vm346 = vweird.f32 %v340
        %vm347 = vmor %vm345, %vm346
        %v348 = vsel %vm347, %v340, %v344
        %v349 = vand.u32 2147483647, %v339
        %vm350 = vcmp.eq.f32.partialorder %v349, 8.507059e+37
        %v351 = vand.u32 %v339, 2147483648
        %v352 = vor.u32 1.1754944e-38, %v351
        %v353 = vsel %vm350, %v352, %v348
        %v354 = vmul.f32 1.0, %v353
        %355 = vst [vmem:[%s188 + $0x10] sm:$0x10] %v354
        %s356 = sand.u32 %s115, 1
        %s357 = scalar_lea.sflag [#allocation3], %s356
        %s358 = sand.u32 %s115, 1
        %s359 = smul.addr %s358, 24
        %s360 = scalar_lea.vmem [#allocation2], %s359
        // Predicated region
        $region37: #{tpu_custom_call.1} parent=35 // pred_check
          %p361 = pneg %p125
        $region38: #{tpu_custom_call.1} parent=35 // pred_check_branch
          %363 = sbr.rel (%p361) target = $region40
        $region39: #{tpu_custom_call.1} parent=35 // pred_region
          %365 = vsyncadd %s357, 0
          %s366 = smul.addr %s18, 8
          %s367 = scalar_lea.hbm %s4, %s366
          %s368 = sshll.u32 %s360, 4
          %s369 = int_to_ptr.vmem [resolvable:$true] %s368
          %s370 = sshll.u32 %s367, 4
          %s371 = int_to_ptr.hbm [resolvable:$true] %s370
          %376 = dma.vmem_to_hbm [thread:$0]  %s369, 384, %s371, %s357, 128, 256, 8
        $region40: #{tpu_custom_call.1} parent=35 // pred_fallthru
          _
      $region36: #{tpu_custom_call.1} parent=5 // pred_fallthru
        _
      %p377 = scmp.le.s32.totalorder 2, %s13
      // Predicated region
      $region41: #{tpu_custom_call.1} parent=5 // pred_check
        %p378 = pneg %p377
      $region42: #{tpu_custom_call.1} parent=5 // pred_check_branch
        %380 = sbr.rel (%p378) target = $region44
      $region43: #{tpu_custom_call.1} parent=5 // pred_region
        %s381 = ssub.s32 %s13, 2
        // Predicated region
        $region45: #{tpu_custom_call.1} parent=43 // pred_check
          %p382 = pneg %p131
        $region46: #{tpu_custom_call.1} parent=43 // pred_check_branch
          %384 = sbr.rel (%p382) target = $region48
        $region47: #{tpu_custom_call.1} parent=43 // pred_region
          %s385 = sand.u32 %s116, 1
          %s386 = scalar_lea.sflag [#allocation3], %s385
          %s387 = sand.u32 %s116, 1
          %s388 = smul.addr %s387, 24
          %s389 = scalar_lea.vmem [#allocation2], %s388
          %391 = dma.done %s386, 384
        $region48: #{tpu_custom_call.1} parent=43 // pred_fallthru
          _
      $region44: #{tpu_custom_call.1} parent=5 // pred_fallthru
        _
    $region6: #{tpu_custom_call.1} parent=1 // loop_footer
      %s17 = sadd.s32 1, %s13
    $region7: #{tpu_custom_call.1} parent=1 // loop_footer_branch
      %12 = sbr.rel target = $region3
    $region8: #{tpu_custom_call.1} parent=1 // loop_exit
      _
    %392 = vsyncpa [#allocation3], 1
    %s393 = scalar_lea.sflag [#allocation3], 1
    %394 = vsyncpa %s393, 1

</llo_original>
